<compile_context>
chip_gen: v5e
topology: v5e:2x2
jax: 0.10.0
libtpu: 0.0.40
codegen_flags: <defaults>
</compile_context>

<pallas_src>
import math

import numpy as np
import jax
import jax.numpy as jnp
from jax.experimental import pallas as pl
from jax.experimental.pallas import tpu as pltpu


def _round_up(a: int, b: int) -> int:
    return -(-a // b) * b


def _nearest_src_indices(out_size: int, in_size: int) -> np.ndarray:
    """PyTorch legacy 'nearest': src = floor(i * in/out) (exact int math)."""
    idx = (np.arange(out_size, dtype=np.int64) * in_size) // out_size
    return np.minimum(idx, in_size - 1)


def _col_onehot(in_size: int, out_size: int) -> np.ndarray:
    """One-hot S[in, out] with S[src[j], j] = 1 (column selection via matmul)."""
    src = _nearest_src_indices(out_size, in_size)
    sel = np.zeros((in_size, out_size), dtype=np.float32)
    sel[src, np.arange(out_size)] = 1.0
    return sel


def _make_kernel(*, res: int, row_src, strided_sH, use_matmul: bool,
                 pre_gathered: bool):
    row_src = tuple(int(r) for r in row_src)

    def kernel(*refs):
        x_ref = refs[0]
        o_ref = refs[-1]
        if pre_gathered:
            # Rows were already selected by the (strided) input DMA.
            xg2 = x_ref[...]                                     # (rows, W)
        else:
            tbc, _, w = x_ref.shape
            if strided_sH is not None:
                # Single strided sublane read: rows 0, sH, 2*sH, ...
                # == floor(i * H / res) for H % res == 0.
                xg = x_ref[:, pl.ds(0, res, stride=strided_sH), :]
            else:
                # Non-integer ratio / upsampling / sub-32-bit dtypes:
                # static gather of the needed source rows.
                xg = jnp.concatenate([x_ref[:, r:r + 1, :] for r in row_src],
                                     axis=1)
            xg2 = xg.reshape(tbc * res, w)                       # free merge
        if use_matmul:
            c_ref = refs[1]
            # One-hot column selection on the MXU: exact copy of source pixels
            # for float inputs (f32 accumulation).
            # TODO(synk): integer inputs with |x| >= 2**24 are not bit-exact
            # through the f32 one-hot matmul; they would need a lane-gather.
            y = jnp.dot(xg2.astype(c_ref.dtype), c_ref[...],
                        preferred_element_type=jnp.float32)
            o_ref[...] = y.astype(o_ref.dtype)
        else:
            o_ref[...] = xg2.astype(o_ref.dtype)

    return kernel


def resize_spatial(x: jax.Array, res: int, *,
                   vmem_budget_bytes: int | None = None) -> jax.Array:
    """Pallas equivalent of ResizeSpatial(res).forward(x). x is NCHW."""
    B, C, H, W = x.shape
    if H == res:
        # Faithful to the module: only shape[2] (height) is checked.
        return x

    BC = B * C
    itemsize = np.dtype(x.dtype).itemsize
    sub = {1: 32, 2: 16}.get(itemsize, 8)      # dtype-aware sublane packing
    is_float = jnp.issubdtype(x.dtype, jnp.floating)

    row_src = _nearest_src_indices(res, H)
    integer_ratio = (res < H) and (H % res == 0)
    # DMA-level row selection is only used when it is a legal rectangular
    # BlockSpec (last block dim W must be a multiple of 128).
    pre_gathered = integer_ratio and (W % 128 == 0)
    # In-kernel strided sublane read (32-bit dtypes only; packed dtypes keep
    # the proven slice+concat fallback).
    strided_sH = (H // res) if (integer_ratio and not pre_gathered
                                and itemsize == 4) else None
    use_matmul = (W != res)

    cdtype = x.dtype if is_float else jnp.float32
    c_mat = jnp.asarray(_col_onehot(W, res), dtype=cdtype) if use_matmul else None
    cd_itemsize = np.dtype(cdtype).itemsize
    c_pad_bytes = (_round_up(W, 8) * _round_up(res, 128) * cd_itemsize
                   if use_matmul else 0)

    # Non-full-extent output blocks must have a sublane-aligned row count.
    align = sub // math.gcd(res, sub)

    # Chip-aware total VMEM budget for the double-buffered working set.
    try:
        vmem_phys = getattr(pltpu.get_tpu_info(), "vmem_capacity_bytes",
                            128 << 20) or (128 << 20)
    except Exception:
        vmem_phys = 128 << 20
    if vmem_budget_bytes is None:
        # v5e/v6e: ~16 MiB working set; v7x (64 MiB physical): stay near 8 MiB
        # and rely on byte-reduction rather than bigger tiles.
        vmem_budget_bytes = (16 << 20) if vmem_phys >= (96 << 20) else (8 << 20)

    def footprint(t: int) -> int:
        """Padded, double-buffered VMEM bytes for a block of t channels."""
        if pre_gathered:
            fin = _round_up(t * res, sub) * W * itemsize
        else:
            fin = t * _round_up(H, sub) * _round_up(W, 128) * itemsize
        fout = _round_up(t * res, sub) * _round_up(res, 128) * itemsize
        return 2 * (fin + fout) + 2 * c_pad_bytes

    if BC <= align or footprint(BC) <= vmem_budget_bytes:
        tbc = BC
    else:
        fa = max(footprint(align), 1)
        t = align * max(1, vmem_budget_bytes // fa)
        t = min(t, (BC // align) * align)
        t = max(align, (t // align) * align)
        while t > align and footprint(t) > vmem_budget_bytes:
            t -= align
        tbc = t

    work_bytes = BC * H * W * itemsize
    nblk = pl.cdiv(BC, tbc)
    if nblk == 1 and BC >= 2 * align and work_bytes >= (1 << 20):
        # Expose at least two blocks so both TensorCores get work (megacore).
        half = (BC // 2 // align) * align
        if half >= align:
            tbc = half
            nblk = pl.cdiv(BC, tbc)
    if nblk > 1 and nblk % 2 == 1:
        # Prefer an even number of blocks (v7x: 2 TensorCores share the grid).
        t2 = tbc - align
        floor_t = max(align, tbc // 2)
        while t2 >= floor_t:
            if pl.cdiv(BC, t2) % 2 == 0:
                tbc = t2
                nblk = pl.cdiv(BC, t2)
                break
            t2 -= align

    vmem_limit = int(min(48 << 20,
                         max(int(footprint(tbc) * 1.3) + (2 << 20), 32 << 20)))

    kernel = _make_kernel(res=res, row_src=row_src, strided_sH=strided_sH,
                          use_matmul=use_matmul, pre_gathered=pre_gathered)

    if pre_gathered:
        # Free reshape: row p = t*res + i, column block 0 == source row i*sH.
        sH = H // res
        x_in = x.reshape(BC * res, sH * W)
        x_spec = pl.BlockSpec((tbc * res, W), lambda i: (i, 0))
        in_read_bytes = BC * res * W * itemsize
    else:
        x_in = x.reshape(BC, H, W)
        x_spec = pl.BlockSpec((tbc, H, W), lambda i: (i, 0, 0))
        in_read_bytes = BC * H * W * itemsize

    in_specs = [x_spec]
    operands = [x_in]
    if use_matmul:
        in_specs.append(pl.BlockSpec((W, res), lambda i: (0, 0)))
        operands.append(c_mat)

    flops = 2 * BC * res * W * res if use_matmul else 0
    bytes_accessed = (in_read_bytes
                      + BC * res * res * itemsize
                      + (W * res * cd_itemsize if use_matmul else 0))

    out_flat = pl.pallas_call(
        kernel,
        out_shape=jax.ShapeDtypeStruct((BC * res, res), x.dtype),
        grid_spec=pltpu.PrefetchScalarGridSpec(
            num_scalar_prefetch=0,
            grid=(nblk,),
            in_specs=in_specs,
            out_specs=pl.BlockSpec((tbc * res, res), lambda i: (i, 0)),
        ),
        compiler_params=pltpu.CompilerParams(
            dimension_semantics=("parallel",),
            vmem_limit_bytes=vmem_limit,
        ),
        cost_estimate=pl.CostEstimate(flops=flops, transcendentals=0,
                                      bytes_accessed=bytes_accessed),
    )(*operands)

    # (B*C*res, res) -> (B, C, res, res): row-major preserving, free reshape.
    return out_flat.reshape(B, C, res, res)


def _reference_resize(x: jax.Array, res: int) -> jax.Array:
    """Pure-JAX reference of PyTorch nearest interpolate(x, res)."""
    B, C, H, W = x.shape
    if H == res:
        return x
    row = _nearest_src_indices(res, H)
    col = _nearest_src_indices(res, W)
    return x[:, :, row, :][:, :, :, col]


if __name__ == "__main__":
    key = jax.random.PRNGKey(0)
    k1, k2, k3, k4, k5 = jax.random.split(key, 5)

    # 1) Main path: integer-ratio downsample, f32, strided in-kernel row read.
    x = jax.random.normal(k1, (2, 4, 16, 16), dtype=jnp.float32)
    y = jax.block_until_ready(resize_spatial(x, 8))
    assert y.shape == (2, 4, 8, 8), y.shape
    np.testing.assert_allclose(np.asarray(y), np.asarray(_reference_resize(x, 8)),
                               rtol=1e-6, atol=1e-6)

    # 2) Multi-block grid (small VMEM budget forces several, even-count blocks).
    x2 = jax.random.normal(k2, (2, 64, 16, 16), dtype=jnp.float32)
    y2 = jax.block_until_ready(resize_spatial(x2, 8, vmem_budget_bytes=300_000))
    np.testing.assert_allclose(np.asarray(y2),
                               np.asarray(_reference_resize(x2, 8)),
                               rtol=1e-6, atol=1e-6)

    # 3) bf16 input: native-dtype gather + one-hot matmul, bit-exact.
    xb = x.astype(jnp.bfloat16)
    yb = jax.block_until_ready(resize_spatial(xb, 8))
    np.testing.assert_array_equal(
        np.asarray(yb).astype(np.float32),
        np.asarray(_reference_resize(xb, 8)).astype(np.float32))

    # 4) Non-integer ratio: static row-gather fallback + column matmul.
    x3 = jax.random.normal(k3, (2, 3, 10, 12), dtype=jnp.float32)
    y3 = jax.block_until_ready(resize_spatial(x3, 8))
    np.testing.assert_allclose(np.asarray(y3),
                               np.asarray(_reference_resize(x3, 8)),
                               rtol=1e-6, atol=1e-6)

    # 5) Upsampling (row replication) path.
    x4 = jax.random.normal(k4, (2, 2, 8, 8), dtype=jnp.float32)
    y4 = jax.block_until_ready(resize_spatial(x4, 16))
    np.testing.assert_allclose(np.asarray(y4),
                               np.asarray(_reference_resize(x4, 16)),
                               rtol=1e-6, atol=1e-6)

    # 6) Row-selective DMA variant (W % 128 == 0): pure strided-copy kernel.
    x5 = jax.random.normal(k5, (1, 2, 256, 128), dtype=jnp.float32)
    y5 = jax.block_until_ready(resize_spatial(x5, 128))
    np.testing.assert_array_equal(np.asarray(y5),
                                  np.asarray(_reference_resize(x5, 128)))

    # 7) Pass-through branch (height already matches res): identity.
    y_same = jax.block_until_ready(resize_spatial(x, 16))
    np.testing.assert_array_equal(np.asarray(y_same), np.asarray(x))

    print("KERNEL_OK")
</pallas_src>

<mosaic_0001>
module attributes {stable_mosaic.version = 11 : i64} {
  func.func @kernel(%arg0: i32, %arg1: memref<8x16x16xf32, #tpu.memory_space<vmem>>, %arg2: memref<16x8xf32, #tpu.memory_space<vmem>>, %arg3: memref<64x8xf32, #tpu.memory_space<vmem>>) attributes {dimension_semantics = [#tpu.dimension_semantics<parallel>], iteration_bounds = array<i64: 1>, scalar_prefetch = 0 : i64, scratch_operands = 0 : i64, tpu.core_type = #tpu.core_type<tc>, window_params = [{transform_indices = @transform_0, window_bounds = array<i64: 8, 16, 16>}, {pipeline_mode = #tpu.pipeline_mode<synchronous>, transform_indices = @transform_1, window_bounds = array<i64: 16, 8>}, {transform_indices = @transform_2, window_bounds = array<i64: 64, 8>}]} {
    %c0 = arith.constant 0 : index
    %c0_0 = arith.constant 0 : index
    %c0_1 = arith.constant 0 : index
    %0 = tpu.strided_load %arg1[%c0, %c0_0, %c0_1] {strides = array<i32: 1, 2, 1>} : memref<8x16x16xf32, #tpu.memory_space<vmem>>, vector<8x8x16xf32>
    %1 = vector.shape_cast %0 : vector<8x8x16xf32> to vector<64x16xf32>
    %c0_2 = arith.constant 0 : index
    %c0_3 = arith.constant 0 : index
    %2 = vector.load %arg2[%c0_2, %c0_3] : memref<16x8xf32, #tpu.memory_space<vmem>>, vector<16x8xf32>
    %cst = arith.constant dense<0.000000e+00> : vector<64x8xf32>
    %3 = tpu.matmul %1, %2, %cst {dimension_numbers = #tpu.dot_dimension_numbers<[1], [0], [0], [1], [0, 0, 1, 1], [], []>} : vector<64x16xf32>, vector<16x8xf32>, vector<64x8xf32> -> vector<64x8xf32>
    %c0_4 = arith.constant 0 : index
    %c0_5 = arith.constant 0 : index
    %4 = vector.load %arg3[%c0_4, %c0_5] : memref<64x8xf32, #tpu.memory_space<vmem>>, vector<64x8xf32>
    tpu.vector_store %arg3[%c0_4, %c0_5], %3 {strides = array<i32>} : memref<64x8xf32, #tpu.memory_space<vmem>>, vector<64x8xf32>,
    return
  }
  func.func @transform_0(%arg0: i32) -> (i32, i32, i32) {
    %c0_i32 = arith.constant 0 : i32
    %c0_i32_0 = arith.constant 0 : i32
    %c0_i32_1 = arith.constant 0 : i32
    return %arg0, %c0_i32, %c0_i32_0 : i32, i32, i32
  }
  func.func @transform_1(%arg0: i32) -> (i32, i32) {
    %c0_i32 = arith.constant 0 : i32
    %c0_i32_0 = arith.constant 0 : i32
    %c0_i32_1 = arith.constant 0 : i32
    return %c0_i32, %c0_i32_0 : i32, i32
  }
  func.func @transform_2(%arg0: i32) -> (i32, i32) {
    %c0_i32 = arith.constant 0 : i32
    %c0_i32_0 = arith.constant 0 : i32
    return %arg0, %c0_i32 : i32, i32
  }
}

</mosaic_0001>

<llo_original>
// kernel: tpu_custom_call.1
$region0: #{tpu_custom_call.1}
  #allocation0 [shape = 'u32[]', space=smem, size = 0x4, offset = 0x4, fixed_abs, tag = 'smem constant byte address 0x4 - core index']
  #allocation1 [shape = 'u32[72,128]{1,0:T(1,128)}', space=vmem, size = 0x9000, scoped, tag = 'internal scratch']
  %s0 = inlined_call_operand.hbm [shape: f32[8,16,16], index: 0, kind: input, shape index: {}]
  %s1 = inlined_call_operand.vmem [shape: f32[16,8], index: 1, kind: input, shape index: {}]
  %s2 = inlined_call_operand.vmem [shape: f32[64,8], index: 2, kind: output, shape index: {}]
  %s3 = sld [smem:[#allocation0]]
  $region22: #{tpu_custom_call.1} parent=0
    _
  %s5 = ssub.s32 1, %s3
  %s6 = scalar_select 0, %s5, %s3
  $region1: #{tpu_custom_call.1} parent=0
    #allocation2 [shape = 'u8[65536]{0}', space=vmem, size = 0x10000, scoped, tag = 'input window, operand 0, single buffered']
    #allocation3 [shape = 's32[1]{0}', space=sflag, size = 0x4, scoped, tag = 'scoped memory for tpu_custom_call.1']
    %7 = vsyncpa [#allocation3], 0
    // Predicated region
    $region2: #{tpu_custom_call.1} parent=1 // pred_check
      _
    $region3: #{tpu_custom_call.1} parent=1 // pred_check_branch
      %9 = sbr.rel (0) target = $region5
    $region4: #{tpu_custom_call.1} parent=1 // pred_region
      %11 = vsyncadd [#allocation3], 0
      %s12 = sshll.u32 %s0, 4
      %s13 = int_to_ptr.hbm [resolvable:$true] %s12
      %s14 = sshll.u32 [#allocation2], 4
      %s15 = int_to_ptr.vmem [resolvable:$true] %s14
      %20 = dma.hbm_to_vmem [thread:$0]  %s13, 2048, %s15, [#allocation3], 128, 128, 8
    $region5: #{tpu_custom_call.1} parent=1 // pred_fallthru
      _
    // Predicated region
    $region6: #{tpu_custom_call.1} parent=1 // pred_check
      _
    $region7: #{tpu_custom_call.1} parent=1 // pred_check_branch
      %22 = sbr.rel (0) target = $region9
    $region8: #{tpu_custom_call.1} parent=1 // pred_region
      _
    $region9: #{tpu_custom_call.1} parent=1 // pred_fallthru
      _
    // Predicated region
    $region10: #{tpu_custom_call.1} parent=1 // pred_check
      _
    $region11: #{tpu_custom_call.1} parent=1 // pred_check_branch
      %24 = sbr.rel (0) target = $region13
    $region12: #{tpu_custom_call.1} parent=1 // pred_region
      %26 = dma.done [#allocation3], 2048
    $region13: #{tpu_custom_call.1} parent=1 // pred_fallthru
      _
    %v27 = vld [vmem:[#allocation2] ss:$2 sm:$0xff]
    %s28 = scalar_lea.vmem [#allocation2], 16
    %v29 = vld [vmem:[%s28] ss:$2 sm:$0xff]
    %s30 = scalar_lea.vmem [#allocation2], 32
    %v31 = vld [vmem:[%s30] ss:$2 sm:$0xff]
    %s32 = scalar_lea.vmem [#allocation2], 48
    %v33 = vld [vmem:[%s32] ss:$2 sm:$0xff]
    %s34 = scalar_lea.vmem [#allocation2], 64
    %v35 = vld [vmem:[%s34] ss:$2 sm:$0xff]
    %s36 = scalar_lea.vmem [#allocation2], 80
    %v37 = vld [vmem:[%s36] ss:$2 sm:$0xff]
    %s38 = scalar_lea.vmem [#allocation2], 96
    %v39 = vld [vmem:[%s38] ss:$2 sm:$0xff]
    %s40 = scalar_lea.vmem [#allocation2], 112
    %v41 = vld [vmem:[%s40] ss:$2 sm:$0xff]
    %v42 = vld [vmem:[%s1] sm:$0xff]
    %v43 = vld [vmem:[%s1 + $0x8] sm:$0xff]
    %vm44 = vcmask 130048
    %v46 = vsel %vm44, %v27, 0
    %v49 = vsel %vm44, %v29, 0
    %v52 = vsel %vm44, %v31, 0
    %v55 = vsel %vm44, %v33, 0
    %v58 = vsel %vm44, %v35, 0
    %v61 = vsel %vm44, %v37, 0
    %v64 = vsel %vm44, %v39, 0
    %v67 = vsel %vm44, %v41, 0
    %69 = vmatpush.msra.mxu0 0.0
    %70 = vmatpush.msra.mxu0 0.0
    %71 = vmatpush.msra.mxu0 0.0
    %72 = vmatpush.msra.mxu0 0.0
    %73 = vmatpush.msra.mxu0 0.0
    %74 = vmatpush.msra.mxu0 0.0
    %75 = vmatpush.msra.mxu0 0.0
    %76 = vmatpush.msra.mxu0 0.0
    %77 = vmatpush.msra.mxu0 0.0
    %78 = vmatpush.msra.mxu0 0.0
    %79 = vmatpush.msra.mxu0 0.0
    %80 = vmatpush.msra.mxu0 0.0
    %81 = vmatpush.msra.mxu0 0.0
    %82 = vmatpush.msra.mxu0 0.0
    %83 = vmatpush.msra.mxu0 %v43
    %84 = vmatpush.msra.mxu0 %v42
    %85 = vmatmul.f32.gmra.mxu0 %v46
    %v86 = vpop.f32.mrf.mxu0
    %v87 = vadd.f32 0.0, %v86
    %88 = vmatmul.f32.gmra.mxu0 %v49
    %v89 = vpop.f32.mrf.mxu0
    %v90 = vadd.f32 0.0, %v89
    %91 = vmatmul.f32.gmra.mxu0 %v52
    %v92 = vpop.f32.mrf.mxu0
    %v93 = vadd.f32 0.0, %v92
    %94 = vmatmul.f32.gmra.mxu0 %v55
    %v95 = vpop.f32.mrf.mxu0
    %v96 = vadd.f32 0.0, %v95
    %97 = vmatmul.f32.gmra.mxu0 %v58
    %v98 = vpop.f32.mrf.mxu0
    %v99 = vadd.f32 0.0, %v98
    %100 = vmatmul.f32.gmra.mxu0 %v61
    %v101 = vpop.f32.mrf.mxu0
    %v102 = vadd.f32 0.0, %v101
    %103 = vmatmul.f32.gmra.mxu0 %v64
    %v104 = vpop.f32.mrf.mxu0
    %v105 = vadd.f32 0.0, %v104
    %106 = vmatmul.f32.gmra.mxu0 %v67
    %v107 = vpop.f32.mrf.mxu0
    %v108 = vadd.f32 0.0, %v107
    %109 = vdwg.mxu0
    %vm110 = vcmask 64512
    %111 = vst.msk [vmem:[%s2] sm:$0xff] %vm110, %v87
    %112 = vst.msk [vmem:[%s2 + $0x8] sm:$0xff] %vm110, %v90
    %113 = vst.msk [vmem:[%s2 + $0x10] sm:$0xff] %vm110, %v93
    %114 = vst.msk [vmem:[%s2 + $0x18] sm:$0xff] %vm110, %v96
    %115 = vst.msk [vmem:[%s2 + $0x20] sm:$0xff] %vm110, %v99
    %116 = vst.msk [vmem:[%s2 + $0x28] sm:$0xff] %vm110, %v102
    %117 = vst.msk [vmem:[%s2 + $0x30] sm:$0xff] %vm110, %v105
    %118 = vst.msk [vmem:[%s2 + $0x38] sm:$0xff] %vm110, %v108
    // Predicated region
    $region14: #{tpu_custom_call.1} parent=1 // pred_check
      _
    $region15: #{tpu_custom_call.1} parent=1 // pred_check_branch
      %120 = sbr.rel (0) target = $region17
    $region16: #{tpu_custom_call.1} parent=1 // pred_region
      _
    $region17: #{tpu_custom_call.1} parent=1 // pred_fallthru
      _
    // Predicated region
    $region18: #{tpu_custom_call.1} parent=1 // pred_check
      _
    $region19: #{tpu_custom_call.1} parent=1 // pred_check_branch
      %122 = sbr.rel (0) target = $region21
    $region20: #{tpu_custom_call.1} parent=1 // pred_region
      _
    $region21: #{tpu_custom_call.1} parent=1 // pred_fallthru
      _
    %123 = vsyncpa [#allocation3], 1

</llo_original>
